<compile_context>
chip_gen: v7x
topology: tpu7x:2x2x1
jax: 0.10.0
libtpu: 0.0.40
codegen_flags: <defaults>
</compile_context>

<pallas_src>
import functools

import jax
import jax.numpy as jnp
from jax.experimental import pallas as pl
from jax.experimental.pallas import tpu as pltpu


def recall_booster_kernel(x_ref, wa_ref, ba_ref, wb_ref, bb_ref, out_ref):
    """One batch tile: h = leaky(x @ Wa + ba); out = leaky(h @ Wb + bb)."""
    x = x_ref[...]

    h = jnp.dot(x, wa_ref[...], preferred_element_type=jnp.float32) + ba_ref[...]
    h = jnp.where(h > 0, h, 0.2 * h)            # LeakyReLU(0.2)

    o = jnp.dot(h, wb_ref[...], preferred_element_type=jnp.float32) + bb_ref[...]
    o = jnp.where(o > 0, o, 0.2 * o)            # LeakyReLU(0.2)

    out_ref[...] = o.astype(out_ref.dtype)


@functools.partial(jax.jit, static_argnames=("tm",))
def recall_booster_forward(x, params, *, tm=16384):
    """x: (B, inp) float32.  params: W0,b0,W1,b1,W2,b2 with W stored (in, out)."""
    B, inp = x.shape
    hidden = params["W1"].shape[1]       # 16
    out_dim = params["W2"].shape[1]

    # Fold the activation-free first two Linears (once, outside the grid).
    W01 = params["W0"] @ params["W1"]                    # (inp, 16)
    b01 = params["b0"] @ params["W1"] + params["b1"]     # (1, 16)
    W2 = params["W2"]                                    # (16, out_dim)
    b2 = params["b2"]                                    # (1, out_dim)

    # 4-way block-diagonal packing for lane-dense loads/stores. The x reshape
    # and the output reshape back are free metadata ops (rows are contiguous).
    pack = 4 if (B % 4 == 0 and B >= 4) else 1
    if pack > 1:
        x_in = x.reshape(B // pack, pack * inp)
        eye = jnp.eye(pack, dtype=W01.dtype)
        Wa = jnp.kron(eye, W01)                          # (pack*inp, pack*hidden)
        Wb = jnp.kron(eye, W2)                           # (pack*hidden, pack*out_dim)
        ba = jnp.tile(b01, (1, pack))
        bb = jnp.tile(b2, (1, pack))
    else:
        x_in, Wa, ba, Wb, bb = x, W01, b01, W2, b2

    rows, in_cols = x_in.shape
    out_cols = pack * out_dim

    # Rows per grid step: biggest tile that fits comfortably, multiple of 8
    # (fp32 sublanes).  No batch padding: Pallas masks the partial last block.
    trows = min(tm // pack, pl.cdiv(rows, 8) * 8)
    trows = max(8, (trows // 8) * 8)
    grid_m = pl.cdiv(rows, trows)

    # Real (lane-padded to 128) VMEM footprint of the double-buffered tiles,
    # plus resident weights; keep headroom, cap at v7x's 64 MiB physical VMEM.
    lane_pad = lambda c: pl.cdiv(c, 128) * 128
    tile_bytes = trows * (lane_pad(in_cols) + lane_pad(out_cols)) * 4
    weight_bytes = (Wa.size + ba.size + Wb.size + bb.size) * 4
    vmem_limit = int(min(64 * 1024 * 1024,
                         max(32 * 1024 * 1024, 4 * tile_bytes + 4 * weight_bytes)))

    cost = pl.CostEstimate(
        flops=2 * rows * (in_cols * pack * hidden + pack * hidden * out_cols),
        transcendentals=0,
        bytes_accessed=(x_in.size + rows * out_cols) * 4 + weight_bytes,
    )

    out = pl.pallas_call(
        recall_booster_kernel,
        out_shape=jax.ShapeDtypeStruct((rows, out_cols), jnp.float32),
        grid=(grid_m,),
        in_specs=[
            pl.BlockSpec((trows, in_cols), lambda i: (i, 0)),   # streamed x tile
            pl.BlockSpec(Wa.shape, lambda i: (0, 0)),           # resident params
            pl.BlockSpec(ba.shape, lambda i: (0, 0)),
            pl.BlockSpec(Wb.shape, lambda i: (0, 0)),
            pl.BlockSpec(bb.shape, lambda i: (0, 0)),
        ],
        out_specs=pl.BlockSpec((trows, out_cols), lambda i: (i, 0)),
        compiler_params=pltpu.CompilerParams(
            dimension_semantics=("parallel",),
            vmem_limit_bytes=vmem_limit,
        ),
        cost_estimate=cost,
    )(x_in, Wa, ba, Wb, bb)

    if pack > 1:
        out = out.reshape(B, out_dim)
    return out


def init_params(key, input_dim, out_dim):
    """Deterministic init mimicking nn.Linear default (uniform +-1/sqrt(fan_in))."""
    ks = jax.random.split(key, 6)

    def lin(kw, kb, fan_in, fan_out):
        bound = 1.0 / jnp.sqrt(jnp.float32(fan_in))
        W = jax.random.uniform(kw, (fan_in, fan_out), jnp.float32, -bound, bound)
        b = jax.random.uniform(kb, (1, fan_out), jnp.float32, -bound, bound)
        return W, b

    W0, b0 = lin(ks[0], ks[1], input_dim, 16)
    W1, b1 = lin(ks[2], ks[3], 16, 16)
    W2, b2 = lin(ks[4], ks[5], 16, out_dim)
    return {"W0": W0, "b0": b0, "W1": W1, "b1": b1, "W2": W2, "b2": b2}


def reference_forward(x, p):
    """Plain-JAX reference matching the PyTorch forward (no fold, no pack)."""
    h0 = x @ p["W0"] + p["b0"]
    z1 = h0 @ p["W1"] + p["b1"]
    h1 = jnp.where(z1 > 0, z1, 0.2 * z1)
    z2 = h1 @ p["W2"] + p["b2"]
    return jnp.where(z2 > 0, z2, 0.2 * z2)


if __name__ == "__main__":
    key = jax.random.PRNGKey(0)
    k_x, k_p, k_x2 = jax.random.split(key, 3)

    # RecallBooster(inputDim=32, outDim=8). batch=300 with tm=128 exercises the
    # packed path (B/4 = 75 packed rows), a multi-step grid (3 tiles of 32
    # packed rows) and a masked partial last block (11 rows).
    batch, input_dim, out_dim = 300, 32, 8
    x = jax.random.normal(k_x, (batch, input_dim), jnp.float32)
    params = init_params(k_p, input_dim, out_dim)

    y = jax.block_until_ready(recall_booster_forward(x, params, tm=128))
    y_ref = reference_forward(x, params)
    assert y.shape == (batch, out_dim)
    assert jnp.allclose(y, y_ref, atol=1e-4, rtol=1e-4), (
        "max abs err = %g" % float(jnp.max(jnp.abs(y - y_ref))))

    # Fallback / tail path: B not a multiple of 4 (unpacked, partial block).
    x2 = jax.random.normal(k_x2, (37, input_dim), jnp.float32)
    y2 = jax.block_until_ready(recall_booster_forward(x2, params, tm=128))
    y2_ref = reference_forward(x2, params)
    assert y2.shape == (37, out_dim)
    assert jnp.allclose(y2, y2_ref, atol=1e-4, rtol=1e-4), (
        "max abs err = %g" % float(jnp.max(jnp.abs(y2 - y2_ref))))

    print("KERNEL_OK")
</pallas_src>

<mosaic_0001>
module attributes {stable_mosaic.version = 11 : i64} {
  func.func @recall_booster_kernel(%arg0: i32, %arg1: memref<32x128xf32, #tpu.memory_space<vmem>>, %arg2: memref<128x64xf32, #tpu.memory_space<vmem>>, %arg3: memref<1x64xf32, #tpu.memory_space<vmem>>, %arg4: memref<64x32xf32, #tpu.memory_space<vmem>>, %arg5: memref<1x32xf32, #tpu.memory_space<vmem>>, %arg6: memref<32x32xf32, #tpu.memory_space<vmem>>) attributes {dimension_semantics = [#tpu.dimension_semantics<parallel>], iteration_bounds = array<i64: 3>, scalar_prefetch = 0 : i64, scratch_operands = 0 : i64, tpu.core_type = #tpu.core_type<tc>, window_params = [{transform_indices = @transform_0, window_bounds = array<i64: 32, 128>}, {pipeline_mode = #tpu.pipeline_mode<synchronous>, transform_indices = @transform_1, window_bounds = array<i64: 128, 64>}, {pipeline_mode = #tpu.pipeline_mode<synchronous>, transform_indices = @transform_2, window_bounds = array<i64: 1, 64>}, {pipeline_mode = #tpu.pipeline_mode<synchronous>, transform_indices = @transform_3, window_bounds = array<i64: 64, 32>}, {pipeline_mode = #tpu.pipeline_mode<synchronous>, transform_indices = @transform_4, window_bounds = array<i64: 1, 32>}, {transform_indices = @transform_5, window_bounds = array<i64: 32, 32>}]} {
    %c0 = arith.constant 0 : index
    %c0_0 = arith.constant 0 : index
    %0 = vector.load %arg1[%c0, %c0_0] : memref<32x128xf32, #tpu.memory_space<vmem>>, vector<32x128xf32>
    %c0_1 = arith.constant 0 : index
    %c0_2 = arith.constant 0 : index
    %1 = vector.load %arg2[%c0_1, %c0_2] : memref<128x64xf32, #tpu.memory_space<vmem>>, vector<128x64xf32>
    %cst = arith.constant dense<0.000000e+00> : vector<32x64xf32>
    %2 = tpu.matmul %0, %1, %cst {dimension_numbers = #tpu.dot_dimension_numbers<[1], [0], [0], [1], [0, 0, 1, 1], [], []>} : vector<32x128xf32>, vector<128x64xf32>, vector<32x64xf32> -> vector<32x64xf32>
    %c0_3 = arith.constant 0 : index
    %c0_4 = arith.constant 0 : index
    %3 = vector.load %arg3[%c0_3, %c0_4] : memref<1x64xf32, #tpu.memory_space<vmem>>, vector<1x64xf32>
    %4 = vector.broadcast %3 : vector<1x64xf32> to vector<32x64xf32>
    %5 = arith.addf %2, %4 : vector<32x64xf32>
    %cst_5 = arith.constant 0.000000e+00 : f32
    %6 = vector.broadcast %cst_5 : f32 to vector<32x64xf32>
    %7 = arith.cmpf ogt, %5, %6 : vector<32x64xf32>
    %cst_6 = arith.constant 2.000000e-01 : f32
    %8 = vector.broadcast %cst_6 : f32 to vector<32x64xf32>
    %9 = arith.mulf %8, %5 : vector<32x64xf32>
    %10 = arith.select %7, %5, %9 : vector<32x64xi1>, vector<32x64xf32>
    %c0_7 = arith.constant 0 : index
    %c0_8 = arith.constant 0 : index
    %11 = vector.load %arg4[%c0_7, %c0_8] : memref<64x32xf32, #tpu.memory_space<vmem>>, vector<64x32xf32>
    %cst_9 = arith.constant dense<0.000000e+00> : vector<32x32xf32>
    %12 = tpu.matmul %10, %11, %cst_9 {dimension_numbers = #tpu.dot_dimension_numbers<[1], [0], [0], [1], [0, 0, 1, 1], [], []>} : vector<32x64xf32>, vector<64x32xf32>, vector<32x32xf32> -> vector<32x32xf32>
    %c0_10 = arith.constant 0 : index
    %c0_11 = arith.constant 0 : index
    %13 = vector.load %arg5[%c0_10, %c0_11] : memref<1x32xf32, #tpu.memory_space<vmem>>, vector<1x32xf32>
    %14 = vector.broadcast %13 : vector<1x32xf32> to vector<32x32xf32>
    %15 = arith.addf %12, %14 : vector<32x32xf32>
    %cst_12 = arith.constant 0.000000e+00 : f32
    %16 = vector.broadcast %cst_12 : f32 to vector<32x32xf32>
    %17 = arith.cmpf ogt, %15, %16 : vector<32x32xf32>
    %cst_13 = arith.constant 2.000000e-01 : f32
    %18 = vector.broadcast %cst_13 : f32 to vector<32x32xf32>
    %19 = arith.mulf %18, %15 : vector<32x32xf32>
    %20 = arith.select %17, %15, %19 : vector<32x32xi1>, vector<32x32xf32>
    %c0_14 = arith.constant 0 : index
    %c0_15 = arith.constant 0 : index
    %21 = vector.load %arg6[%c0_14, %c0_15] : memref<32x32xf32, #tpu.memory_space<vmem>>, vector<32x32xf32>
    tpu.vector_store %arg6[%c0_14, %c0_15], %20 {strides = array<i32>} : memref<32x32xf32, #tpu.memory_space<vmem>>, vector<32x32xf32>,
    return
  }
  func.func @transform_0(%arg0: i32) -> (i32, i32) {
    %c0_i32 = arith.constant 0 : i32
    %c0_i32_0 = arith.constant 0 : i32
    return %arg0, %c0_i32 : i32, i32
  }
  func.func @transform_1(%arg0: i32) -> (i32, i32) {
    %c0_i32 = arith.constant 0 : i32
    %c0_i32_0 = arith.constant 0 : i32
    %c0_i32_1 = arith.constant 0 : i32
    return %c0_i32, %c0_i32_0 : i32, i32
  }
  func.func @transform_2(%arg0: i32) -> (i32, i32) {
    %c0_i32 = arith.constant 0 : i32
    %c0_i32_0 = arith.constant 0 : i32
    %c0_i32_1 = arith.constant 0 : i32
    return %c0_i32, %c0_i32_0 : i32, i32
  }
  func.func @transform_3(%arg0: i32) -> (i32, i32) {
    %c0_i32 = arith.constant 0 : i32
    %c0_i32_0 = arith.constant 0 : i32
    %c0_i32_1 = arith.constant 0 : i32
    return %c0_i32, %c0_i32_0 : i32, i32
  }
  func.func @transform_4(%arg0: i32) -> (i32, i32) {
    %c0_i32 = arith.constant 0 : i32
    %c0_i32_0 = arith.constant 0 : i32
    %c0_i32_1 = arith.constant 0 : i32
    return %c0_i32, %c0_i32_0 : i32, i32
  }
  func.func @transform_5(%arg0: i32) -> (i32, i32) {
    %c0_i32 = arith.constant 0 : i32
    %c0_i32_0 = arith.constant 0 : i32
    return %arg0, %c0_i32 : i32, i32
  }
}

</mosaic_0001>

<llo_original>
// kernel: recall_booster_forward.1
$region0: #{recall_booster_forward.1}
  #allocation0 [shape = 'u32[]', space=smem, size = 0x4, offset = 0x4, fixed_abs, tag = 'smem constant byte address 0x4 - core index']
  #allocation1 [shape = 'u32[144,128]{1,0:T(1,128)}', space=vmem, size = 0x12000, scoped, tag = 'internal scratch']
  %s0 = inlined_call_operand.vmem [shape: f32[75,128], index: 0, kind: input, shape index: {}]
  %s1 = inlined_call_operand.vmem [shape: f32[128,64], index: 1, kind: input, shape index: {}]
  %s2 = inlined_call_operand.vmem [shape: f32[1,64], index: 2, kind: input, shape index: {}]
  %s3 = inlined_call_operand.vmem [shape: f32[64,32], index: 3, kind: input, shape index: {}]
  %s4 = inlined_call_operand.vmem [shape: f32[1,32], index: 4, kind: input, shape index: {}]
  %s5 = inlined_call_operand.vmem [shape: f32[75,32], index: 5, kind: output, shape index: {}]
  %s6 = sld [smem:[#allocation0]]
  $region101: #{recall_booster_forward.1} parent=0
    _
  %s8 = ssub.s32 1, %s6
  %s9 = scalar_select 0, %s8, %s6
  $region1: #{recall_booster_forward.1} parent=0
    #allocation2 [shape = 'u8[32768]{0}', space=vmem, size = 0x8000, scoped, tag = 'output window, operand 0']
    loop: start=0, step=1, limit=5
    $region2: #{recall_booster_forward.1} parent=1 // loop_pre_header
      _
    $region3: #{recall_booster_forward.1} parent=1 // loop_header
      %s11 = sphi 0, %s15
      %p12 = scmp.ge.s32.totalorder %s11, 5
      %s21 = sphi 0, %s23
      %s24 = sphi 0, %s21
      %s25 = sphi 0, %s24
      %s41 = sphi 0, %s25
      %s45 = sphi 0, %s45
      %s47 = sphi 0, %s45
      %s48 = sphi 0, %s47
      %s62 = sphi 0, %s48
      %s66 = sphi 0, %s66
      %s68 = sphi 0, %s66
      %s69 = sphi 0, %s68
      %s83 = sphi 0, %s69
      %s87 = sphi 0, %s87
      %s89 = sphi 0, %s87
      %s90 = sphi 0, %s89
      %s104 = sphi 0, %s90
      %s108 = sphi 0, %s108
      %s110 = sphi 0, %s108
      %s111 = sphi 0, %s110
      %s125 = sphi 0, %s111
      %s131 = sphi 0, %s133
      %s134 = sphi 0, %s131
      %s135 = sphi 0, %s134
      %s151 = sphi 0, %s135
    $region4: #{recall_booster_forward.1} parent=1 // loop_header_branch
      %14 = sbr.rel (%p12) target = $region8
    $region5: #{recall_booster_forward.1} parent=1 // loop_body
      %s16 = ssub.s32 %s11, 1
      %s17 = ssub.s32 %s11, 2
      %s18 = sadd.s32 %s11, 1
      %s19 = ssub.s32 %s11, %s18
      %p20 = scmp.eq.s32.totalorder %s19, 0
      %s22 = sadd.s32 %s21, 1
      %s23 = scalar_select %p20, %s21, %s22
      %p26 = pneg %p20
      %p27 = scmp.eq.s32.totalorder %s11, 2
      %p28 = por %p26, %p27
      %p29 = scmp.ne.s32.totalorder %s21, %s24
      %p30 = scmp.eq.s32.totalorder %s11, 0
      %p31 = por %p29, %p30
      %p32 = scmp.ne.s32.totalorder %s21, %s24
      %p33 = scmp.eq.s32.totalorder %s16, 2
      %p34 = por %p32, %p33
      %p35 = scmp.ne.s32.totalorder %s24, %s25
      %p36 = scmp.eq.s32.totalorder %s16, 0
      %p37 = por %p35, %p36
      %p38 = scmp.ne.s32.totalorder %s24, %s25
      %p39 = scmp.eq.s32.totalorder %s17, 2
      %p40 = por %p38, %p39
      %p42 = scmp.ne.s32.totalorder %s25, %s41
      %p43 = scmp.eq.s32.totalorder %s17, 0
      %p44 = por %p42, %p43
      %s46 = sadd.s32 %s45, 1
      %p49 = scmp.eq.s32.totalorder %s11, 2
      %p50 = scmp.ne.s32.totalorder %s45, %s47
      %p51 = scmp.eq.s32.totalorder %s11, 0
      %p52 = por %p50, %p51
      %p53 = scmp.ne.s32.totalorder %s45, %s47
      %p54 = scmp.eq.s32.totalorder %s16, 2
      %p55 = por %p53, %p54
      %p56 = scmp.ne.s32.totalorder %s47, %s48
      %p57 = scmp.eq.s32.totalorder %s16, 0
      %p58 = por %p56, %p57
      %p59 = scmp.ne.s32.totalorder %s47, %s48
      %p60 = scmp.eq.s32.totalorder %s17, 2
      %p61 = por %p59, %p60
      %p63 = scmp.ne.s32.totalorder %s48, %s62
      %p64 = scmp.eq.s32.totalorder %s17, 0
      %p65 = por %p63, %p64
      %s67 = sadd.s32 %s66, 1
      %p70 = scmp.eq.s32.totalorder %s11, 2
      %p71 = scmp.ne.s32.totalorder %s66, %s68
      %p72 = scmp.eq.s32.totalorder %s11, 0
      %p73 = por %p71, %p72
      %p74 = scmp.ne.s32.totalorder %s66, %s68
      %p75 = scmp.eq.s32.totalorder %s16, 2
      %p76 = por %p74, %p75
      %p77 = scmp.ne.s32.totalorder %s68, %s69
      %p78 = scmp.eq.s32.totalorder %s16, 0
      %p79 = por %p77, %p78
      %p80 = scmp.ne.s32.totalorder %s68, %s69
      %p81 = scmp.eq.s32.totalorder %s17, 2
      %p82 = por %p80, %p81
      %p84 = scmp.ne.s32.totalorder %s69, %s83
      %p85 = scmp.eq.s32.totalorder %s17, 0
      %p86 = por %p84, %p85
      %s88 = sadd.s32 %s87, 1
      %p91 = scmp.eq.s32.totalorder %s11, 2
      %p92 = scmp.ne.s32.totalorder %s87, %s89
      %p93 = scmp.eq.s32.totalorder %s11, 0
      %p94 = por %p92, %p93
      %p95 = scmp.ne.s32.totalorder %s87, %s89
      %p96 = scmp.eq.s32.totalorder %s16, 2
      %p97 = por %p95, %p96
      %p98 = scmp.ne.s32.totalorder %s89, %s90
      %p99 = scmp.eq.s32.totalorder %s16, 0
      %p100 = por %p98, %p99
      %p101 = scmp.ne.s32.totalorder %s89, %s90
      %p102 = scmp.eq.s32.totalorder %s17, 2
      %p103 = por %p101, %p102
      %p105 = scmp.ne.s32.totalorder %s90, %s104
      %p106 = scmp.eq.s32.totalorder %s17, 0
      %p107 = por %p105, %p106
      %s109 = sadd.s32 %s108, 1
      %p112 = scmp.eq.s32.totalorder %s11, 2
      %p113 = scmp.ne.s32.totalorder %s108, %s110
      %p114 = scmp.eq.s32.totalorder %s11, 0
      %p115 = por %p113, %p114
      %p116 = scmp.ne.s32.totalorder %s108, %s110
      %p117 = scmp.eq.s32.totalorder %s16, 2
      %p118 = por %p116, %p117
      %p119 = scmp.ne.s32.totalorder %s110, %s111
      %p120 = scmp.eq.s32.totalorder %s16, 0
      %p121 = por %p119, %p120
      %p122 = scmp.ne.s32.totalorder %s110, %s111
      %p123 = scmp.eq.s32.totalorder %s17, 2
      %p124 = por %p122, %p123
      %p126 = scmp.ne.s32.totalorder %s111, %s125
      %p127 = scmp.eq.s32.totalorder %s17, 0
      %p128 = por %p126, %p127
      %s129 = ssub.s32 %s11, %s18
      %p130 = scmp.eq.s32.totalorder %s129, 0
      %s132 = sadd.s32 %s131, 1
      %s133 = scalar_select %p130, %s131, %s132
      %p136 = pneg %p130
      %p137 = scmp.eq.s32.totalorder %s11, 2
      %p138 = por %p136, %p137
      %p139 = scmp.ne.s32.totalorder %s131, %s134
      %p140 = scmp.eq.s32.totalorder %s11, 0
      %p141 = por %p139, %p140
      %p142 = scmp.ne.s32.totalorder %s131, %s134
      %p143 = scmp.eq.s32.totalorder %s16, 2
      %p144 = por %p142, %p143
      %p145 = scmp.ne.s32.totalorder %s134, %s135
      %p146 = scmp.eq.s32.totalorder %s16, 0
      %p147 = por %p145, %p146
      %p148 = scmp.ne.s32.totalorder %s134, %s135
      %p149 = scmp.eq.s32.totalorder %s17, 2
      %p150 = por %p148, %p149
      %p152 = scmp.ne.s32.totalorder %s135, %s151
      %p153 = scmp.eq.s32.totalorder %s17, 0
      %p154 = por %p152, %p153
      %p155 = scmp.le.s32.totalorder 1, %s11
      %p156 = scmp.lt.s32.totalorder %s11, 4
      %p157 = pnand %p155, %p156
      %p158 = pneg %p157
      // Predicated region
      $region9: #{recall_booster_forward.1} parent=5 // pred_check
        _
      $region10: #{recall_booster_forward.1} parent=5 // pred_check_branch
        %160 = sbr.rel (%p157) target = $region12
      $region11: #{recall_booster_forward.1} parent=5 // pred_region
        %s161 = ssub.s32 %s11, 1
        // Predicated region
        $region13: #{recall_booster_forward.1} parent=11 // pred_check
          %p162 = pneg %p58
        $region14: #{recall_booster_forward.1} parent=11 // pred_check_branch
          %164 = sbr.rel (%p162) target = $region16
        $region15: #{recall_booster_forward.1} parent=11 // pred_region
          _
        $region16: #{recall_booster_forward.1} parent=11 // pred_fallthru
          _
        // Predicated region
        $region17: #{recall_booster_forward.1} parent=11 // pred_check
          %p165 = pneg %p79
        $region18: #{recall_booster_forward.1} parent=11 // pred_check_branch
          %167 = sbr.rel (%p165) target = $region20
        $region19: #{recall_booster_forward.1} parent=11 // pred_region
          _
        $region20: #{recall_booster_forward.1} parent=11 // pred_fallthru
          _
        // Predicated region
        $region21: #{recall_booster_forward.1} parent=11 // pred_check
          %p168 = pneg %p100
        $region22: #{recall_booster_forward.1} parent=11 // pred_check_branch
          %170 = sbr.rel (%p168) target = $region24
        $region23: #{recall_booster_forward.1} parent=11 // pred_region
          _
        $region24: #{recall_booster_forward.1} parent=11 // pred_fallthru
          _
        // Predicated region
        $region25: #{recall_booster_forward.1} parent=11 // pred_check
          %p171 = pneg %p121
        $region26: #{recall_booster_forward.1} parent=11 // pred_check_branch
          %173 = sbr.rel (%p171) target = $region28
        $region27: #{recall_booster_forward.1} parent=11 // pred_region
          _
        $region28: #{recall_booster_forward.1} parent=11 // pred_fallthru
          _
      $region12: #{recall_booster_forward.1} parent=5 // pred_fallthru
        _
      %p174 = scmp.lt.s32.totalorder %s11, 3
      // Predicated region
      $region29: #{recall_booster_forward.1} parent=5 // pred_check
        %p175 = pneg %p174
      $region30: #{recall_booster_forward.1} parent=5 // pred_check_branch
        %177 = sbr.rel (%p175) target = $region32
      $region31: #{recall_booster_forward.1} parent=5 // pred_region
        // Predicated region
        $region33: #{recall_booster_forward.1} parent=31 // pred_check
          %p178 = pneg %p31
        $region34: #{recall_booster_forward.1} parent=31 // pred_check_branch
          %180 = sbr.rel (%p178) target = $region36
        $region35: #{recall_booster_forward.1} parent=31 // pred_region
          %s181 = smul.u32 4, %s11
          %s182 = ssub.s32 10, %s181
          %p183 = scmp.lt.s32.totalorder %s182, 4
          %s184 = scalar_select %p183, %s182, 4
          %s185 = smul.u32 128, %s184
          %p186 = scmp.lt.s32.totalorder %s181, 9
          %s187 = scalar_select %p186, %s181, 9
          %s188 = smul.addr %s187, 8
          %s189 = scalar_lea.vmem %s0, %s188
          %s190 = smul.u32 4, %s11
          %s191 = ssub.s32 10, %s190
          %p192 = scmp.lt.s32.totalorder %s191, 4
          %s193 = scalar_select %p192, %s191, 4
          %s194 = smul.u32 128, %s193
        $region36: #{recall_booster_forward.1} parent=31 // pred_fallthru
          _
      $region32: #{recall_booster_forward.1} parent=5 // pred_fallthru
        _
      %p195 = scmp.le.s32.totalorder 1, %s11
      %p196 = scmp.lt.s32.totalorder %s11, 4
      %p197 = pnand %p195, %p196
      %p198 = pneg %p197
      // Predicated region
      $region37: #{recall_booster_forward.1} parent=5 // pred_check
        _
      $region38: #{recall_booster_forward.1} parent=5 // pred_check_branch
        %200 = sbr.rel (%p197) target = $region40
      $region39: #{recall_booster_forward.1} parent=5 // pred_region
        %s201 = ssub.s32 %s11, 1
        %s202 = smul.u32 4, %s16
        %s203 = ssub.s32 10, %s202
        %p204 = scmp.lt.s32.totalorder %s203, 4
        %s205 = scalar_select %p204, %s203, 4
        %s206 = smul.u32 128, %s205
        %p207 = scmp.lt.s32.totalorder %s202, 9
        %s208 = scalar_select %p207, %s202, 9
        %s209 = smul.addr %s208, 8
        %s210 = scalar_lea.vmem %s0, %s209
        %p211 = pneg %p37
        %p212 = pneg %p34
        %p213 = pneg %p58
        %p214 = pneg %p55
        %p215 = pneg %p79
        %p216 = pneg %p76
        %p217 = pneg %p100
        %p218 = pneg %p97
        %p219 = pneg %p121
        %p220 = pneg %p118
        %p221 = pneg %p147
        %p222 = pneg %p144
        %s223 = sand.u32 %s134, 1
        %s224 = sand.u32 %s134, 1
        %s225 = smul.addr %s224, 32
        %s226 = scalar_lea.vmem [#allocation2], %s225
        %s227 = smul.u32 4, %s16
        %s228 = ssub.s32 10, %s227
        %p229 = scmp.lt.s32.totalorder %s228, 4
        %s230 = scalar_select %p229, %s228, 4
        %s231 = smul.u32 128, %s230
        %p232 = scmp.lt.s32.totalorder %s227, 9
        %s233 = scalar_select %p232, %s227, 9
        %s234 = smul.addr %s233, 8
        %s235 = scalar_lea.vmem %s0, %s234
        %s236 = smul.u32 4, %s16
        %s237 = ssub.s32 10, %s236
        %p238 = scmp.lt.s32.totalorder %s237, 4
        %s239 = scalar_select %p238, %s237, 4
        %s240 = smul.u32 128, %s239
        %s241 = smul.u32 4, %s16
        %s242 = ssub.s32 10, %s241
        %p243 = scmp.lt.s32.totalorder %s242, 4
        %s244 = scalar_select %p243, %s242, 4
        %s245 = smul.u32 128, %s244
        %v246 = vld [vmem:[%s235] sm:$0xff]
        %v247 = vld [vmem:[%s235 + $0x8] sm:$0xff]
        %v248 = vld [vmem:[%s235 + $0x10] sm:$0xff]
        %v249 = vld [vmem:[%s235 + $0x18] sm:$0xff]
        %v250 = vld [vmem:[%s1] sm:$0xff]
        %v251 = vld [vmem:[%s1 + $0x8] sm:$0xff]
        %v252 = vld [vmem:[%s1 + $0x10] sm:$0xff]
        %v253 = vld [vmem:[%s1 + $0x18] sm:$0xff]
        %v254 = vld [vmem:[%s1 + $0x20] sm:$0xff]
        %v255 = vld [vmem:[%s1 + $0x28] sm:$0xff]
        %v256 = vld [vmem:[%s1 + $0x30] sm:$0xff]
        %v257 = vld [vmem:[%s1 + $0x38] sm:$0xff]
        %v258 = vld [vmem:[%s1 + $0x40] sm:$0xff]
        %v259 = vld [vmem:[%s1 + $0x48] sm:$0xff]
        %v260 = vld [vmem:[%s1 + $0x50] sm:$0xff]
        %v261 = vld [vmem:[%s1 + $0x58] sm:$0xff]
        %v262 = vld [vmem:[%s1 + $0x60] sm:$0xff]
        %v263 = vld [vmem:[%s1 + $0x68] sm:$0xff]
        %v264 = vld [vmem:[%s1 + $0x70] sm:$0xff]
        %v265 = vld [vmem:[%s1 + $0x78] sm:$0xff]
        %v266 = vld [vmem:[%s2] sm:$0x1]
        %v268 = vlaneseq
        %v269 = vshrl.u32 %v268, 7
        %v270 = vsub.s32 0, %v269
        %v271 = vrot.slane %v266, %v270
        %273 = vmatprep.subr.mxu0 0.0
        %274 = vmatpush1.msra.mxu0 %v250
        %275 = vmatprep.subr.mxu0 0.0
        %276 = vmatpush1.msra.mxu0 %v251
        %277 = vmatprep.subr.mxu0 0.0
        %278 = vmatpush1.msra.mxu0 %v252
        %279 = vmatprep.subr.mxu0 0.0
        %280 = vmatpush1.msra.mxu0 %v253
        %281 = vmatprep.subr.mxu0 0.0
        %282 = vmatpush1.msra.mxu0 %v254
        %283 = vmatprep.subr.mxu0 0.0
        %284 = vmatpush1.msra.mxu0 %v255
        %285 = vmatprep.subr.mxu0 0.0
        %286 = vmatpush1.msra.mxu0 %v256
        %287 = vmatprep.subr.mxu0 0.0
        %288 = vmatpush1.msra.mxu0 %v257
        %289 = vmatprep.subr.mxu0 0.0
        %290 = vmatpush1.msra.mxu0 %v258
        %291 = vmatprep.subr.mxu0 0.0
        %292 = vmatpush1.msra.mxu0 %v259
        %293 = vmatprep.subr.mxu0 0.0
        %294 = vmatpush1.msra.mxu0 %v260
        %295 = vmatprep.subr.mxu0 0.0
        %296 = vmatpush1.msra.mxu0 %v261
        %297 = vmatprep.subr.mxu0 0.0
        %298 = vmatpush1.msra.mxu0 %v262
        %299 = vmatprep.subr.mxu0 0.0
        %300 = vmatpush1.msra.mxu0 %v263
        %301 = vmatprep.subr.mxu0 0.0
        %302 = vmatpush1.msra.mxu0 %v264
        %303 = vmatprep.subr.mxu0 0.0
        %304 = vmatpush1.msra.mxu0 %v265
        %305 = vmatprep.subr.mxu0 0.0
        %306 = vmatpush1.msra.mxu0 0.0
        %307 = vmatprep.subr.mxu0 0.0
        %308 = vmatpush1.msra.mxu0 0.0
        %309 = vmatprep.subr.mxu0 0.0
        %310 = vmatpush1.msra.mxu0 0.0
        %311 = vmatprep.subr.mxu0 0.0
        %312 = vmatpush1.msra.mxu0 0.0
        %313 = vmatprep.subr.mxu0 0.0
        %314 = vmatpush1.msra.mxu0 0.0
        %315 = vmatprep.subr.mxu0 0.0
        %316 = vmatpush1.msra.mxu0 0.0
        %317 = vmatprep.subr.mxu0 0.0
        %318 = vmatpush1.msra.mxu0 0.0
        %319 = vmatprep.subr.mxu0 0.0
        %320 = vmatpush1.msra.mxu0 0.0
        %321 = vmatprep.subr.mxu0 0.0
        %322 = vmatpush1.msra.mxu0 0.0
        %323 = vmatprep.subr.mxu0 0.0
        %324 = vmatpush1.msra.mxu0 0.0
        %325 = vmatprep.subr.mxu0 0.0
        %326 = vmatpush1.msra.mxu0 0.0
        %327 = vmatprep.subr.mxu0 0.0
        %328 = vmatpush1.msra.mxu0 0.0
        %329 = vmatprep.subr.mxu0 0.0
        %330 = vmatpush1.msra.mxu0 0.0
        %331 = vmatprep.subr.mxu0 0.0
        %332 = vmatpush1.msra.mxu0 0.0
        %333 = vmatprep.subr.mxu0 0.0
        %334 = vmatpush1.msra.mxu0 0.0
        %335 = vmatprep.subr.mxu0 0.0
        %336 = vmatpush1.msra.mxu0 0.0
        %337 = vmatprep.mubr.f32.mxu0 0.0
        %338 = vmatmul.mubr.f32.gmra.mrb[0].mxu0 %v246
        %v339 = vpop.f32.mrb[0].mxu0
        %v340 = vadd.f32 %v271, %v339
        %v341 = vpop.f32.mrb[0].mxu0
        %342 = vmatprep.mubr.f32.mxu0 0.0
        %343 = vmatmul.mubr.f32.gmra.mrb[0].mxu0 %v247
        %v344 = vpop.f32.mrb[0].mxu0
        %v345 = vadd.f32 %v271, %v344
        %v346 = vpop.f32.mrb[0].mxu0
        %347 = vmatprep.mubr.f32.mxu0 0.0
        %348 = vmatmul.mubr.f32.gmra.mrb[0].mxu0 %v248
        %v349 = vpop.f32.mrb[0].mxu0
        %v350 = vadd.f32 %v271, %v349
        %v351 = vpop.f32.mrb[0].mxu0
        %352 = vmatprep.mubr.f32.mxu0 0.0
        %353 = vmatmul.mubr.f32.gmra.mrb[0].mxu0 %v249
        %v354 = vpop.f32.mrb[0].mxu0
        %v355 = vadd.f32 %v271, %v354
        %v356 = vpop.f32.mrb[0].mxu0
        %357 = vdwg.mxu0
        %vm358 = vcmp.gt.f32.partialorder %v340, 0.0
        %vm359 = vcmp.gt.f32.partialorder %v345, 0.0
        %vm360 = vcmp.gt.f32.partialorder %v350, 0.0
        %vm361 = vcmp.gt.f32.partialorder %v355, 0.0
        %v362 = vmul.f32 %v340, 0.2
        %v363 = vmul.f32 %v345, 0.2
        %v364 = vmul.f32 %v350, 0.2
        %v365 = vmul.f32 %v355, 0.2
        %v366 = vsel %vm358, %v340, %v362
        %v367 = vsel %vm359, %v345, %v363
        %v368 = vsel %vm360, %v350, %v364
        %v369 = vsel %vm361, %v355, %v365
        %v370 = vld [vmem:[%s3] sm:$0xff]
        %v371 = vld [vmem:[%s3 + $0x8] sm:$0xff]
        %v372 = vld [vmem:[%s3 + $0x10] sm:$0xff]
        %v373 = vld [vmem:[%s3 + $0x18] sm:$0xff]
        %v374 = vld [vmem:[%s3 + $0x20] sm:$0xff]
        %v375 = vld [vmem:[%s3 + $0x28] sm:$0xff]
        %v376 = vld [vmem:[%s3 + $0x30] sm:$0xff]
        %v377 = vld [vmem:[%s3 + $0x38] sm:$0xff]
        %v378 = vld [vmem:[%s4] sm:$0x1]
        %v380 = vlaneseq
        %v381 = vshrl.u32 %v380, 7
        %v382 = vsub.s32 0, %v381
        %v383 = vrot.slane %v378, %v382
        %vm385 = vcmask 523264
        %v387 = vsel %vm385, %v366, 0
        %v390 = vsel %vm385, %v367, 0
        %v393 = vsel %vm385, %v368, 0
        %v396 = vsel %vm385, %v369, 0
        %398 = vmatprep.subr.mxu0 0.0
        %399 = vmatpush1.msra.mxu0 %v370
        %400 = vmatprep.subr.mxu0 0.0
        %401 = vmatpush1.msra.mxu0 %v371
        %402 = vmatprep.subr.mxu0 0.0
        %403 = vmatpush1.msra.mxu0 %v372
        %404 = vmatprep.subr.mxu0 0.0
        %405 = vmatpush1.msra.mxu0 %v373
        %406 = vmatprep.subr.mxu0 0.0
        %407 = vmatpush1.msra.mxu0 %v374
        %408 = vmatprep.subr.mxu0 0.0
        %409 = vmatpush1.msra.mxu0 %v375
        %410 = vmatprep.subr.mxu0 0.0
        %411 = vmatpush1.msra.mxu0 %v376
        %412 = vmatprep.subr.mxu0 0.0
        %413 = vmatpush1.msra.mxu0 %v377
        %414 = vmatprep.subr.mxu0 0.0
        %415 = vmatpush1.msra.mxu0 0.0
        %416 = vmatprep.subr.mxu0 0.0
        %417 = vmatpush1.msra.mxu0 0.0
        %418 = vmatprep.subr.mxu0 0.0
        %419 = vmatpush1.msra.mxu0 0.0
        %420 = vmatprep.subr.mxu0 0.0
        %421 = vmatpush1.msra.mxu0 0.0
        %422 = vmatprep.subr.mxu0 0.0
        %423 = vmatpush1.msra.mxu0 0.0
        %424 = vmatprep.subr.mxu0 0.0
        %425 = vmatpush1.msra.mxu0 0.0
        %426 = vmatprep.subr.mxu0 0.0
        %427 = vmatpush1.msra.mxu0 0.0
        %428 = vmatprep.subr.mxu0 0.0
        %429 = vmatpush1.msra.mxu0 0.0
        %430 = vmatprep.subr.mxu0 0.0
        %431 = vmatpush1.msra.mxu0 0.0
        %432 = vmatprep.subr.mxu0 0.0
        %433 = vmatpush1.msra.mxu0 0.0
        %434 = vmatprep.subr.mxu0 0.0
        %435 = vmatpush1.msra.mxu0 0.0
        %436 = vmatprep.subr.mxu0 0.0
        %437 = vmatpush1.msra.mxu0 0.0
        %438 = vmatprep.subr.mxu0 0.0
        %439 = vmatpush1.msra.mxu0 0.0
        %440 = vmatprep.subr.mxu0 0.0
        %441 = vmatpush1.msra.mxu0 0.0
        %442 = vmatprep.subr.mxu0 0.0
        %443 = vmatpush1.msra.mxu0 0.0
        %444 = vmatprep.subr.mxu0 0.0
        %445 = vmatpush1.msra.mxu0 0.0
        %446 = vmatprep.subr.mxu0 0.0
        %447 = vmatpush1.msra.mxu0 0.0
        %448 = vmatprep.subr.mxu0 0.0
        %449 = vmatpush1.msra.mxu0 0.0
        %450 = vmatprep.subr.mxu0 0.0
        %451 = vmatpush1.msra.mxu0 0.0
        %452 = vmatprep.subr.mxu0 0.0
        %453 = vmatpush1.msra.mxu0 0.0
        %454 = vmatprep.subr.mxu0 0.0
        %455 = vmatpush1.msra.mxu0 0.0
        %456 = vmatprep.subr.mxu0 0.0
        %457 = vmatpush1.msra.mxu0 0.0
        %458 = vmatprep.subr.mxu0 0.0
        %459 = vmatpush1.msra.mxu0 0.0
        %460 = vmatprep.subr.mxu0 0.0
        %461 = vmatpush1.msra.mxu0 0.0
        %462 = vmatprep.mubr.f32.mxu0 0.0
        %463 = vmatmul.mubr.f32.gmra.mrb[0].mxu0 %v387
        %v464 = vpop.f32.mrb[0].mxu0
        %v465 = vadd.f32 %v383, %v464
        %v466 = vpop.f32.mrb[0].mxu0
        %467 = vmatprep.mubr.f32.mxu0 0.0
        %468 = vmatmul.mubr.f32.gmra.mrb[0].mxu0 %v390
        %v469 = vpop.f32.mrb[0].mxu0
        %v470 = vadd.f32 %v383, %v469
        %v471 = vpop.f32.mrb[0].mxu0
        %472 = vmatprep.mubr.f32.mxu0 0.0
        %473 = vmatmul.mubr.f32.gmra.mrb[0].mxu0 %v393
        %v474 = vpop.f32.mrb[0].mxu0
        %v475 = vadd.f32 %v383, %v474
        %v476 = vpop.f32.mrb[0].mxu0
        %477 = vmatprep.mubr.f32.mxu0 0.0
        %478 = vmatmul.mubr.f32.gmra.mrb[0].mxu0 %v396
        %v479 = vpop.f32.mrb[0].mxu0
        %v480 = vadd.f32 %v383, %v479
        %v481 = vpop.f32.mrb[0].mxu0
        %482 = vdwg.mxu0
        %vm483 = vcmp.gt.f32.partialorder %v465, 0.0
        %vm484 = vcmp.gt.f32.partialorder %v470, 0.0
        %vm485 = vcmp.gt.f32.partialorder %v475, 0.0
        %vm486 = vcmp.gt.f32.partialorder %v480, 0.0
        %v487 = vmul.f32 %v465, 0.2
        %v488 = vmul.f32 %v470, 0.2
        %v489 = vmul.f32 %v475, 0.2
        %v490 = vmul.f32 %v480, 0.2
        %v491 = vsel %vm483, %v465, %v487
        %v492 = vsel %vm484, %v470, %v488
        %v493 = vsel %vm485, %v475, %v489
        %v494 = vsel %vm486, %v480, %v490
        %vm495 = vcmask 261120
        %496 = vst.msk [vmem:[%s226] sm:$0xff] %vm495, %v491
        %497 = vst.msk [vmem:[%s226 + $0x8] sm:$0xff] %vm495, %v492
        %498 = vst.msk [vmem:[%s226 + $0x10] sm:$0xff] %vm495, %v493
        %499 = vst.msk [vmem:[%s226 + $0x18] sm:$0xff] %vm495, %v494
        %s500 = sand.u32 %s134, 1
        %s501 = sand.u32 %s134, 1
        %s502 = smul.addr %s501, 32
        %s503 = scalar_lea.vmem [#allocation2], %s502
        // Predicated region
        $region41: #{recall_booster_forward.1} parent=39 // pred_check
          %p504 = pneg %p144
        $region42: #{recall_booster_forward.1} parent=39 // pred_check_branch
          %506 = sbr.rel (%p504) target = $region44
        $region43: #{recall_booster_forward.1} parent=39 // pred_region
          %s507 = smul.u32 4, %s16
          %s508 = ssub.s32 10, %s507
          %p509 = scmp.lt.s32.totalorder %s508, 4
          %s510 = scalar_select %p509, %s508, 4
          %s511 = smul.u32 128, %s510
          %p512 = scmp.ne.s32.totalorder 0, %s511
          %s513 = smul.addr %s507, 8
          %s514 = scalar_lea.vmem %s5, %s513
          // Predicated region
          $region45: #{recall_booster_forward.1} parent=43 // pred_check
            %p515 = pneg %p512
          $region46: #{recall_booster_forward.1} parent=43 // pred_check_branch
            %517 = sbr.rel (%p515) target = $region48
          $region47: #{recall_booster_forward.1} parent=43 // pred_region
            // Predicated region
            $region49: #{recall_booster_forward.1} parent=47 // pred_check
              _
            $region50: #{recall_booster_forward.1} parent=47 // pred_check_branch
              %519 = sbr.rel (0) target = $region52
            $region51: #{recall_booster_forward.1} parent=47 // pred_region
              // Predicated region
              $region71: #{recall_booster_forward.1} parent=51 // pred_check
                _
              $region72: #{recall_booster_forward.1} parent=51 // pred_check_branch
                %574 = sbr.rel (0) target = $region74
              $region73: #{recall_booster_forward.1} parent=51 // pred_region
                %s575 = sshrl.u32 %s510, 2
                // While loop
                $region75: #{recall_booster_forward.1} parent=73 // loop_pre_header
                  _
                $region76: #{recall_booster_forward.1} parent=73 // loop_header
                  %s577 = sphi 0, %s579
                  %p578 = scmp.ge.s32.totalorder %s577, %s575
                  %s582 = sphi 0, %s595
                  %s583 = sphi %s503, %s598
                  %s584 = sphi %s514, %s599
                $region77: #{recall_booster_forward.1} parent=73 // loop_header_branch
                  %581 = sbr.rel (%p578) target = $region81
                $region78: #{recall_booster_forward.1} parent=73 // loop_body
                  %v585 = vld [vmem:[%s583] sm:$0xff]
                  %586 = vst [vmem:[%s584] sm:$0xff] %v585
                  %v587 = vld [vmem:[%s583 + $0x8] sm:$0xff]
                  %588 = vst [vmem:[%s584 + $0x8] sm:$0xff] %v587
                  %v589 = vld [vmem:[%s583 + $0x10] sm:$0xff]
                  %590 = vst [vmem:[%s584 + $0x10] sm:$0xff] %v589
                  %v591 = vld [vmem:[%s583 + $0x18] sm:$0xff]
                  %592 = vst [vmem:[%s584 + $0x18] sm:$0xff] %v591
                  %s593 = sadd.s32 1, %s582
                  %p594 = scmp.ge.s32.totalorder %s593, %s575
                  %s595 = scalar_select %p594, 0, %s593
                  %s596 = smul.u32 %s595, 32
                  %s597 = smul.u32 %s595, 32
                  %s598 = scalar_lea.vmem %s503, %s596 [#allocation2]
                  %s599 = scalar_lea.vmem %s514, %s597
                $region79: #{recall_booster_forward.1} parent=73 // loop_footer
                  %s579 = sadd.s32 %s577, 1
                $region80: #{recall_booster_forward.1} parent=73 // loop_footer_branch
                  %576 = sbr.rel target = $region76
                $region81: #{recall_booster_forward.1} parent=73 // loop_exit
                  _
                %s600 = sshrl.u32 %s510, 2
                %s601 = sand.u32 %s510, 3
                %s602 = smul.u32 %s600, 4
                %s603 = smul.u32 8, %s602
                %s604 = scalar_lea.vmem %s503, %s603 [#allocation2]
                %s605 = smul.u32 8, %s602
                %s606 = scalar_lea.vmem %s514, %s605
                // While loop
                $region82: #{recall_booster_forward.1} parent=73 // loop_pre_header
                  _
                $region83: #{recall_booster_forward.1} parent=73 // loop_header
                  %s608 = sphi 0, %s610
                  %p609 = scmp.ge.s32.totalorder %s608, %s601
                  %s613 = sphi 0, %s620
                  %s614 = sphi %s604, %s623
                  %s615 = sphi %s606, %s624
                $region84: #{recall_booster_forward.1} parent=73 // loop_header_branch
                  %612 = sbr.rel (%p609) target = $region88
                $region85: #{recall_booster_forward.1} parent=73 // loop_body
                  %v616 = vld [vmem:[%s614] sm:$0xff]
                  %617 = vst [vmem:[%s615] sm:$0xff] %v616
                  %s618 = sadd.s32 1, %s613
                  %p619 = scmp.ge.s32.totalorder %s618, %s601
                  %s620 = scalar_select %p619, 0, %s618
                  %s621 = smul.u32 %s620, 8
                  %s622 = smul.u32 %s620, 8
                  %s623 = scalar_lea.vmem %s604, %s621 [#allocation2]
                  %s624 = scalar_lea.vmem %s606, %s622
                $region86: #{recall_booster_forward.1} parent=73 // loop_footer
                  %s610 = sadd.s32 %s608, 1
                $region87: #{recall_booster_forward.1} parent=73 // loop_footer_branch
                  %607 = sbr.rel target = $region83
                $region88: #{recall_booster_forward.1} parent=73 // loop_exit
                  _
              $region74: #{recall_booster_forward.1} parent=51 // pred_fallthru
                _
              // Predicated region
              $region89: #{recall_booster_forward.1} parent=51 // pred_check
                _
              $region90: #{recall_booster_forward.1} parent=51 // pred_check_branch
                %626 = sbr.rel target = $region92
              $region91: #{recall_booster_forward.1} parent=51 // pred_region
                _
              $region92: #{recall_booster_forward.1} parent=51 // pred_fallthru
                _
            $region52: #{recall_booster_forward.1} parent=47 // pred_fallthru
              _
            // Predicated region
            $region53: #{recall_booster_forward.1} parent=47 // pred_check
              _
            $region54: #{recall_booster_forward.1} parent=47 // pred_check_branch
              %521 = sbr.rel target = $region56
            $region55: #{recall_booster_forward.1} parent=47 // pred_region
              %s523 = sshrl.u32 %s510, 2
              // While loop
              $region57: #{recall_booster_forward.1} parent=55 // loop_pre_header
                _
              $region58: #{recall_booster_forward.1} parent=55 // loop_header
                %s525 = sphi 0, %s527
                %p526 = scmp.ge.s32.totalorder %s525, %s523
                %s530 = sphi 0, %s543
                %s531 = sphi %s503, %s546
                %s532 = sphi %s514, %s547
              $region59: #{recall_booster_forward.1} parent=55 // loop_header_branch
                %529 = sbr.rel (%p526) target = $region63
              $region60: #{recall_booster_forward.1} parent=55 // loop_body
                %v533 = vld [vmem:[%s531] sm:$0xff]
                %534 = vst [vmem:[%s532] sm:$0xff] %v533
                %v535 = vld [vmem:[%s531 + $0x8] sm:$0xff]
                %536 = vst [vmem:[%s532 + $0x8] sm:$0xff] %v535
                %v537 = vld [vmem:[%s531 + $0x10] sm:$0xff]
                %538 = vst [vmem:[%s532 + $0x10] sm:$0xff] %v537
                %v539 = vld [vmem:[%s531 + $0x18] sm:$0xff]
                %540 = vst [vmem:[%s532 + $0x18] sm:$0xff] %v539
                %s541 = sadd.s32 1, %s530
                %p542 = scmp.ge.s32.totalorder %s541, %s523
                %s543 = scalar_select %p542, 0, %s541
                %s544 = smul.u32 %s543, 32
                %s545 = smul.u32 %s543, 32
                %s546 = scalar_lea.vmem %s503, %s544 [#allocation2]
                %s547 = scalar_lea.vmem %s514, %s545
              $region61: #{recall_booster_forward.1} parent=55 // loop_footer
                %s527 = sadd.s32 %s525, 1
              $region62: #{recall_booster_forward.1} parent=55 // loop_footer_branch
                %524 = sbr.rel target = $region58
              $region63: #{recall_booster_forward.1} parent=55 // loop_exit
                _
              %s548 = sshrl.u32 %s510, 2
              %s549 = sand.u32 %s510, 3
              %s550 = smul.u32 %s548, 4
              %s551 = smul.u32 8, %s550
              %s552 = scalar_lea.vmem %s503, %s551 [#allocation2]
              %s553 = smul.u32 8, %s550
              %s554 = scalar_lea.vmem %s514, %s553
              // While loop
              $region64: #{recall_booster_forward.1} parent=55 // loop_pre_header
                _
              $region65: #{recall_booster_forward.1} parent=55 // loop_header
                %s556 = sphi 0, %s558
                %p557 = scmp.ge.s32.totalorder %s556, %s549
                %s561 = sphi 0, %s568
                %s562 = sphi %s552, %s571
                %s563 = sphi %s554, %s572
              $region66: #{recall_booster_forward.1} parent=55 // loop_header_branch
                %560 = sbr.rel (%p557) target = $region70
              $region67: #{recall_booster_forward.1} parent=55 // loop_body
                %v564 = vld [vmem:[%s562] sm:$0xff]
                %565 = vst [vmem:[%s563] sm:$0xff] %v564
                %s566 = sadd.s32 1, %s561
                %p567 = scmp.ge.s32.totalorder %s566, %s549
                %s568 = scalar_select %p567, 0, %s566
                %s569 = smul.u32 %s568, 8
                %s570 = smul.u32 %s568, 8
                %s571 = scalar_lea.vmem %s552, %s569 [#allocation2]
                %s572 = scalar_lea.vmem %s554, %s570
              $region68: #{recall_booster_forward.1} parent=55 // loop_footer
                %s558 = sadd.s32 %s556, 1
              $region69: #{recall_booster_forward.1} parent=55 // loop_footer_branch
                %555 = sbr.rel target = $region65
              $region70: #{recall_booster_forward.1} parent=55 // loop_exit
                _
            $region56: #{recall_booster_forward.1} parent=47 // pred_fallthru
              _
          $region48: #{recall_booster_forward.1} parent=43 // pred_fallthru
            _
          %627 = vnop
        $region44: #{recall_booster_forward.1} parent=39 // pred_fallthru
          _
      $region40: #{recall_booster_forward.1} parent=5 // pred_fallthru
        _
      %p628 = scmp.le.s32.totalorder 2, %s11
      // Predicated region
      $region93: #{recall_booster_forward.1} parent=5 // pred_check
        %p629 = pneg %p628
      $region94: #{recall_booster_forward.1} parent=5 // pred_check_branch
        %631 = sbr.rel (%p629) target = $region96
      $region95: #{recall_booster_forward.1} parent=5 // pred_region
        %s632 = ssub.s32 %s11, 2
        // Predicated region
        $region97: #{recall_booster_forward.1} parent=95 // pred_check
          %p633 = pneg %p150
        $region98: #{recall_booster_forward.1} parent=95 // pred_check_branch
          %635 = sbr.rel (%p633) target = $region100
        $region99: #{recall_booster_forward.1} parent=95 // pred_region
          %s636 = sand.u32 %s135, 1
          %s637 = sand.u32 %s135, 1
          %s638 = smul.addr %s637, 32
          %s639 = scalar_lea.vmem [#allocation2], %s638
        $region100: #{recall_booster_forward.1} parent=95 // pred_fallthru
          _
      $region96: #{recall_booster_forward.1} parent=5 // pred_fallthru
        _
    $region6: #{recall_booster_forward.1} parent=1 // loop_footer
      %s15 = sadd.s32 1, %s11
    $region7: #{recall_booster_forward.1} parent=1 // loop_footer_branch
      %10 = sbr.rel target = $region3
    $region8: #{recall_booster_forward.1} parent=1 // loop_exit
      _

</llo_original>
